<compile_context>
chip_gen: v7x
topology: tpu7x:2x2x1
jax: 0.10.0
libtpu: 0.0.40
codegen_flags: <defaults>
</compile_context>

<pallas_src>
import functools

import jax
import jax.numpy as jnp
import numpy as np
from jax.experimental import pallas as pl
from jax.experimental.pallas import tpu as pltpu

SQRT_HALF = 0.7071067811865476

_ROW_TILE_CAP = 1024              # target rows per branch-linear tile
_HW_TILE_CAP = 1024               # HW tile for c-branch / combine kernels
_VMEM_LIMIT = 48 * 1024 * 1024    # explicit scoped-VMEM budget (v5e/v6e/v7x safe)


def _erf(x):
    # Abramowitz & Stegun 7.1.26 rational approximation (max abs err ~1.5e-7).
    a1, a2, a3, a4, a5 = (0.254829592, -0.284496736, 1.421413741,
                          -1.453152027, 1.061405429)
    p = 0.3275911
    ax = jnp.abs(x)
    t = 1.0 / (1.0 + p * ax)
    poly = ((((a5 * t + a4) * t + a3) * t + a2) * t + a1) * t
    y = 1.0 - poly * jnp.exp(-ax * ax)
    return jnp.where(x >= 0, y, -y)


def _gelu_exact(x):
    return 0.5 * x * (1.0 + _erf(x * SQRT_HALF))


def _round_up(n, m):
    return ((n + m - 1) // m) * m


def _pick_hw_tile(hw, cap=_HW_TILE_CAP):
    """HW tile (second-to-last block dim): multiple of 8 or full extent."""
    if hw <= cap:
        return hw, hw                    # full extent: always layout-legal
    t = (cap // 8) * 8
    return t, _round_up(hw, t)


def _pick_group_tile(n_groups, rows_per_group, cap_rows=_ROW_TILE_CAP):
    """Groups-per-tile for the h/w branch kernels (group = one (b, seg) slab)."""
    cap_g = max(1, cap_rows // max(rows_per_group, 1))
    if n_groups <= cap_g:
        # Split once so a v7x dual-TC chip gets a >=2-wide parallel grid axis
        # (only when the halves stay layout-legal multiples of 8).
        if n_groups >= 16 and n_groups % 16 == 0:
            return n_groups // 2, n_groups
        return n_groups, n_groups
    gt = max(8, (cap_g // 8) * 8)
    return gt, _round_up(n_groups, gt)


# ---------------------------------------------------------------------------
# Kernel A (c branch): y = x @ Wt per (batch, HW-tile) + resident per-batch
# channel-sum accumulator (P3 pattern across the "arbitrary" HW axis).
# ---------------------------------------------------------------------------
def _linear_batched_sum_kernel(x_ref, wt_ref, o_ref, s_ref):
    @pl.when(pl.program_id(1) == 0)
    def _():
        s_ref[...] = jnp.zeros_like(s_ref)
    y = jnp.dot(x_ref[0], wt_ref[...], preferred_element_type=jnp.float32)
    o_ref[0] = y.astype(o_ref.dtype)
    s_ref[0] = s_ref[0] + jnp.sum(y, axis=0, keepdims=True)


def linear_batched_sum_pallas(x3d, wt, thw, store_dtype):
    B, HWp, C = x3d.shape
    N = wt.shape[1]
    embed, sums = pl.pallas_call(
        _linear_batched_sum_kernel,
        out_shape=(jax.ShapeDtypeStruct((B, HWp, N), store_dtype),
                   jax.ShapeDtypeStruct((B, 1, N), jnp.float32)),
        grid_spec=pltpu.PrefetchScalarGridSpec(
            num_scalar_prefetch=0,
            grid=(B, HWp // thw),
            in_specs=[
                pl.BlockSpec((1, thw, C), lambda b, j: (b, j, 0)),
                pl.BlockSpec((C, N), lambda b, j: (0, 0)),
            ],
            out_specs=[
                pl.BlockSpec((1, thw, N), lambda b, j: (b, j, 0)),
                pl.BlockSpec((1, 1, N), lambda b, j: (b, 0, 0)),
            ],
        ),
        compiler_params=pltpu.CompilerParams(
            dimension_semantics=("parallel", "arbitrary"),
            vmem_limit_bytes=_VMEM_LIMIT),
    )(x3d, wt)
    return embed, sums.reshape(B, N)


# ---------------------------------------------------------------------------
# Kernel B (h / w branches): tiled y = x @ Wt over rows grouped as
# (batch*seg, rows_per_group) + per-group column sums (one shot, no residency).
# ---------------------------------------------------------------------------
def _linear_group_sum_kernel(x_ref, wt_ref, o_ref, s_ref, *, groups, rpg):
    y = jnp.dot(x_ref[...], wt_ref[...], preferred_element_type=jnp.float32)
    o_ref[...] = y.astype(o_ref.dtype)
    s_ref[...] = jnp.sum(y.reshape(groups, rpg, y.shape[-1]), axis=1)


def linear_group_sum_pallas(x2d, wt, n_groups, rpg, store_dtype):
    M, K = x2d.shape
    N = wt.shape[1]
    assert M == n_groups * rpg
    gt, Gp = _pick_group_tile(n_groups, rpg)
    if Gp != n_groups:
        x2d = jnp.pad(x2d, ((0, (Gp - n_groups) * rpg), (0, 0)))
    kernel = functools.partial(_linear_group_sum_kernel, groups=gt, rpg=rpg)
    embed, sums = pl.pallas_call(
        kernel,
        out_shape=(jax.ShapeDtypeStruct((Gp * rpg, N), store_dtype),
                   jax.ShapeDtypeStruct((Gp, N), jnp.float32)),
        grid_spec=pltpu.PrefetchScalarGridSpec(
            num_scalar_prefetch=0,
            grid=(Gp // gt,),
            in_specs=[
                pl.BlockSpec((gt * rpg, K), lambda i: (i, 0)),
                pl.BlockSpec((K, N), lambda i: (0, 0)),
            ],
            out_specs=[
                pl.BlockSpec((gt * rpg, N), lambda i: (i, 0)),
                pl.BlockSpec((gt, N), lambda i: (i, 0)),
            ],
        ),
        compiler_params=pltpu.CompilerParams(
            dimension_semantics=("parallel",),
            vmem_limit_bytes=_VMEM_LIMIT),
    )(x2d, wt)
    if Gp != n_groups:
        embed = embed[:n_groups * rpg]
        sums = sums[:n_groups]
    return embed, sums


# ---------------------------------------------------------------------------
# Kernel C: mean finalize (sum the 3 partial channel sums, scale by 1/HW) +
# reweighting MLP (fc1 -> exact GELU -> fc2) + 3-way softmax, all B rows at
# once.  fc2 was pre-reordered so the softmax branches are contiguous column
# blocks: out[:, 0:C]=c-weights, [C:2C]=w-weights, [2C:3C]=h-weights.
# ---------------------------------------------------------------------------
def _reweight_kernel(cs_ref, hs_ref, ws_ref, w1t_ref, b1_ref, w2t_ref, b2_ref,
                     o_ref, *, C, inv_hw, approx):
    m = (cs_ref[...] + hs_ref[...] + ws_ref[...]) * inv_hw            # (B, C)
    hid = jnp.dot(m, w1t_ref[...],
                  preferred_element_type=jnp.float32) + b1_ref[...]
    hid = _gelu_exact(hid)                                            # (B, C//4)
    logits = jnp.dot(hid, w2t_ref[...],
                     preferred_element_type=jnp.float32) + b2_ref[...]  # (B, 3C)
    l0 = logits[:, 0:C]
    l1 = logits[:, C:2 * C]
    l2 = logits[:, 2 * C:3 * C]
    mx = jnp.maximum(jnp.maximum(l0, l1), l2)
    e0 = jnp.exp(l0 - mx)
    e1 = jnp.exp(l1 - mx)
    e2 = jnp.exp(l2 - mx)
    den = e0 + e1 + e2
    if approx:
        inv = pl.reciprocal(den, approx=True)   # EUP slot, effectively free
    else:
        inv = 1.0 / den
    o_ref[:, 0:C] = e0 * inv
    o_ref[:, C:2 * C] = e1 * inv
    o_ref[:, 2 * C:3 * C] = e2 * inv


def reweight_pallas(c_sum, h_sum, w_sum, w1t, b1, w2t, b2, inv_hw, approx):
    B, C = c_sum.shape
    Cq = w1t.shape[1]
    kernel = functools.partial(_reweight_kernel, C=C, inv_hw=inv_hw,
                               approx=approx)
    return pl.pallas_call(
        kernel,
        out_shape=jax.ShapeDtypeStruct((B, 3 * C), jnp.float32),
        grid_spec=pltpu.PrefetchScalarGridSpec(
            num_scalar_prefetch=0,
            grid=(1,),
            in_specs=[
                pl.BlockSpec((B, C), lambda i: (0, 0)),
                pl.BlockSpec((B, C), lambda i: (0, 0)),
                pl.BlockSpec((B, C), lambda i: (0, 0)),
                pl.BlockSpec((C, Cq), lambda i: (0, 0)),
                pl.BlockSpec((1, Cq), lambda i: (0, 0)),
                pl.BlockSpec((Cq, 3 * C), lambda i: (0, 0)),
                pl.BlockSpec((1, 3 * C), lambda i: (0, 0)),
            ],
            out_specs=pl.BlockSpec((B, 3 * C), lambda i: (0, 0)),
        ),
        compiler_params=pltpu.CompilerParams(
            dimension_semantics=("arbitrary",)),
    )(c_sum, h_sum, w_sum, w1t, b1, w2t, b2)


# ---------------------------------------------------------------------------
# Kernel D: weighted combine + final proj (+bias), tiled over (B, HW).
# Embed inputs are bf16 in the fast path; attn / bias / accumulation stay f32.
# ---------------------------------------------------------------------------
def _combine_kernel(c_ref, h_ref, w_ref, a_ref, wpt_ref, bp_ref, o_ref, *, C):
    aw = a_ref[0]                             # (1, 3C) f32: [c | w | h] weights
    a_c = aw[:, 0:C]
    a_w = aw[:, C:2 * C]
    a_h = aw[:, 2 * C:3 * C]
    # x = c_embed*weight[0] + w_embed*weight[1] + h_embed*weight[2]
    comb = c_ref[0] * a_c + w_ref[0] * a_w + h_ref[0] * a_h      # f32
    out = jnp.dot(comb.astype(wpt_ref.dtype), wpt_ref[...],
                  preferred_element_type=jnp.float32) + bp_ref[...]
    o_ref[0] = out.astype(o_ref.dtype)


def combine_pallas(c_e, h_e, w_e, attn, wpt, bp, thw, out_dtype):
    B, HWp, C = c_e.shape
    kernel = functools.partial(_combine_kernel, C=C)
    return pl.pallas_call(
        kernel,
        out_shape=jax.ShapeDtypeStruct((B, HWp, C), out_dtype),
        grid_spec=pltpu.PrefetchScalarGridSpec(
            num_scalar_prefetch=0,
            grid=(B, HWp // thw),
            in_specs=[
                pl.BlockSpec((1, thw, C), lambda b, j: (b, j, 0)),
                pl.BlockSpec((1, thw, C), lambda b, j: (b, j, 0)),
                pl.BlockSpec((1, thw, C), lambda b, j: (b, j, 0)),
                pl.BlockSpec((1, 1, 3 * C), lambda b, j: (b, 0, 0)),
                pl.BlockSpec((C, C), lambda b, j: (0, 0)),
                pl.BlockSpec((1, C), lambda b, j: (0, 0)),
            ],
            out_specs=pl.BlockSpec((1, thw, C), lambda b, j: (b, j, 0)),
        ),
        compiler_params=pltpu.CompilerParams(
            dimension_semantics=("parallel", "parallel"),
            vmem_limit_bytes=_VMEM_LIMIT),
    )(c_e, h_e, w_e, attn, wpt, bp)


# ---------------------------------------------------------------------------
# Full forward
# ---------------------------------------------------------------------------
def weighted_permute_mlp_forward(x, params, seg_dim, matmul_dtype=jnp.bfloat16):
    """matmul_dtype=jnp.bfloat16: bf16 operands AND bf16-stored embeddings with
    f32 MXU accumulation (fast, HBM-traffic ~halved).
    matmul_dtype=jnp.float32: full f32 path for tight validation."""
    B, H, W, C = x.shape
    S = C // seg_dim
    assert H * S == C and W * S == C, "mlp_h/mlp_w need H == W == seg_dim"
    mm_dt = jnp.dtype(matmul_dtype)
    strict = mm_dt == jnp.dtype(jnp.float32)
    store_dt = jnp.float32 if strict else jnp.bfloat16
    approx = not strict
    out_dtype = x.dtype

    xc = x.astype(mm_dt)                    # single cast; bf16 halves x DMAs and
    wc_t = params["wc"].T.astype(mm_dt)     # the h/w-branch relayout traffic
    wh_t = params["wh"].T.astype(mm_dt)
    ww_t = params["ww"].T.astype(mm_dt)
    wp_t = params["wp"].T.astype(mm_dt)

    HW = H * W
    thw, HWp = _pick_hw_tile(HW)

    # --- branch c: channel linear + fused per-batch channel sum -------------
    xc3 = xc.reshape(B, HW, C)
    if HWp != HW:
        xc3 = jnp.pad(xc3, ((0, 0), (0, HWp - HW), (0, 0)))
    c_embed, c_sum = linear_batched_sum_pallas(xc3, wc_t, thw, store_dt)

    # --- branch h: mix along (H, S) for each (B, seg, W) ---------------------
    xh = (xc.reshape(B, H, W, seg_dim, S)
             .transpose(0, 3, 2, 1, 4)
             .reshape(B * seg_dim * W, H * S))
    h_lin, h_colsum = linear_group_sum_pallas(xh, wh_t, B * seg_dim, W, store_dt)
    h_embed = (h_lin.reshape(B, seg_dim, W, H, S)
                     .transpose(0, 3, 2, 1, 4)
                     .reshape(B, HW, C))
    h_sum = h_colsum.reshape(B, seg_dim, H, S).sum(axis=2).reshape(B, C)

    # --- branch w: mix along (W, S) for each (B, seg, H) ---------------------
    xw = (xc.reshape(B, H, W, seg_dim, S)
             .transpose(0, 3, 1, 2, 4)
             .reshape(B * seg_dim * H, W * S))
    w_lin, w_colsum = linear_group_sum_pallas(xw, ww_t, B * seg_dim, H, store_dt)
    w_embed = (w_lin.reshape(B, seg_dim, H, W, S)
                     .transpose(0, 2, 3, 1, 4)
                     .reshape(B, HW, C))
    w_sum = w_colsum.reshape(B, seg_dim, W, S).sum(axis=2).reshape(B, C)

    # --- reweighting MLP (mean finalize fused in-kernel) ---------------------
    # Re-order fc2 rows so the 3 softmax branches become contiguous column
    # blocks: reordered col k*C+c == torch row c*3+k.
    Cq = params["w1"].shape[0]
    w2r = params["w2"].reshape(C, 3, Cq).transpose(1, 0, 2).reshape(3 * C, Cq)
    b2r = params["b2"].reshape(C, 3).T.reshape(3 * C)
    attn = reweight_pallas(
        c_sum, h_sum, w_sum,
        params["w1"].T.astype(jnp.float32),
        params["b1"].reshape(1, Cq).astype(jnp.float32),
        w2r.T.astype(jnp.float32),
        b2r.reshape(1, 3 * C).astype(jnp.float32),
        1.0 / float(HW), approx).reshape(B, 1, 3 * C)

    # --- weighted combine + proj ---------------------------------------------
    if HWp != HW:
        pad = ((0, 0), (0, HWp - HW), (0, 0))
        h_embed = jnp.pad(h_embed, pad)
        w_embed = jnp.pad(w_embed, pad)
    out = combine_pallas(c_embed, h_embed, w_embed, attn, wp_t,
                         params["bp"].reshape(1, C).astype(jnp.float32),
                         thw, out_dtype)
    if HWp != HW:
        out = out[:, :HW]
    return out.reshape(B, H, W, C)


# ---------------------------------------------------------------------------
# Pure-JAX reference (mirrors the PyTorch forward, eval mode)
# ---------------------------------------------------------------------------
def reference_forward(x, params, seg_dim):
    B, H, W, C = x.shape
    S = C // seg_dim
    c_embed = x @ params["wc"].T
    h = (x.reshape(B, H, W, seg_dim, S).transpose(0, 3, 2, 1, 4)
           .reshape(B, seg_dim, W, H * S)) @ params["wh"].T
    h_embed = (h.reshape(B, seg_dim, W, H, S).transpose(0, 3, 2, 1, 4)
                 .reshape(B, H, W, C))
    w = (x.reshape(B, H, W, seg_dim, S).transpose(0, 3, 1, 2, 4)
           .reshape(B, seg_dim, H, W * S)) @ params["ww"].T
    w_embed = (w.reshape(B, seg_dim, H, W, S).transpose(0, 2, 3, 1, 4)
                 .reshape(B, H, W, C))
    weight = (c_embed + h_embed + w_embed).transpose(0, 3, 1, 2)
    weight = weight.reshape(B, C, -1).mean(-1)
    hid = jax.nn.gelu(weight @ params["w1"].T + params["b1"], approximate=False)
    logits = hid @ params["w2"].T + params["b2"]
    wgt = jax.nn.softmax(logits.reshape(B, C, 3).transpose(2, 0, 1), axis=0)
    wgt = wgt[:, :, None, None, :]
    y = c_embed * wgt[0] + w_embed * wgt[1] + h_embed * wgt[2]
    return y @ params["wp"].T + params["bp"]


if __name__ == "__main__":
    key = jax.random.PRNGKey(0)
    B, H, W = 2, 8, 8
    seg_dim = 8
    C = 32                      # dim; S = C // seg_dim = 4, H*S == W*S == C
    keys = jax.random.split(key, 10)

    def u(k, shape, fan_in):
        bound = 1.0 / float(fan_in) ** 0.5
        return jax.random.uniform(k, shape, jnp.float32, -bound, bound)

    params = {
        "wc": u(keys[0], (C, C), C),                # mlp_c.weight  (no bias)
        "wh": u(keys[1], (C, C), C),                # mlp_h.weight  (no bias)
        "ww": u(keys[2], (C, C), C),                # mlp_w.weight  (no bias)
        "w1": u(keys[3], (C // 4, C), C),           # reweighting.fc1.weight
        "b1": u(keys[4], (C // 4,), C),             # reweighting.fc1.bias
        "w2": u(keys[5], (3 * C, C // 4), C // 4),  # reweighting.fc2.weight
        "b2": u(keys[6], (3 * C,), C // 4),         # reweighting.fc2.bias
        "wp": u(keys[7], (C, C), C),                # proj.weight
        "bp": u(keys[8], (C,), C),                  # proj.bias
    }
    x = jax.random.normal(keys[9], (B, H, W, C), jnp.float32)

    ref = reference_forward(x, params, seg_dim)

    # Strict f32 path.
    out_f32 = weighted_permute_mlp_forward(x, params, seg_dim,
                                           matmul_dtype=jnp.float32)
    out_f32 = jax.block_until_ready(out_f32)
    assert out_f32.shape == (B, H, W, C)
    np.testing.assert_allclose(np.asarray(out_f32), np.asarray(ref),
                               rtol=2e-3, atol=2e-3)

    # Fast path: bf16 operands + bf16-stored embeddings, f32 accumulation.
    out_bf16 = weighted_permute_mlp_forward(x, params, seg_dim,
                                            matmul_dtype=jnp.bfloat16)
    out_bf16 = jax.block_until_ready(out_bf16)
    np.testing.assert_allclose(np.asarray(out_bf16), np.asarray(ref),
                               rtol=5e-2, atol=5e-2)

    print("KERNEL_OK")
</pallas_src>

<mosaic_0001>
module attributes {stable_mosaic.version = 11 : i64} {
  func.func @_linear_batched_sum_kernel(%arg0: i32, %arg1: i32, %arg2: memref<1x64x32xf32, #tpu.memory_space<vmem>>, %arg3: memref<32x32xf32, #tpu.memory_space<vmem>>, %arg4: memref<1x64x32xf32, #tpu.memory_space<vmem>>, %arg5: memref<1x1x32xf32, #tpu.memory_space<vmem>>) attributes {dimension_semantics = [#tpu.dimension_semantics<parallel>, #tpu.dimension_semantics<arbitrary>], iteration_bounds = array<i64: 2, 1>, scalar_prefetch = 0 : i64, scratch_operands = 0 : i64, tpu.core_type = #tpu.core_type<tc>, window_params = [{transform_indices = @transform_0, window_bounds = array<i64: 1, 64, 32>}, {pipeline_mode = #tpu.pipeline_mode<synchronous>, transform_indices = @transform_1, window_bounds = array<i64: 32, 32>}, {transform_indices = @transform_2, window_bounds = array<i64: 1, 64, 32>}, {transform_indices = @transform_3, window_bounds = array<i64: 1, 1, 32>}]} {
    %c0_i32 = arith.constant 0 : i32
    %0 = arith.cmpi eq, %arg1, %c0_i32 : i32
    %1 = arith.extui %0 : i1 to i32
    %c0_i32_0 = arith.constant 0 : i32
    %2 = arith.cmpi ne, %1, %c0_i32_0 : i32
    scf.if %2 {
      %cst_15 = arith.constant 0.000000e+00 : f32
      %18 = vector.broadcast %cst_15 : f32 to vector<1x1x32xf32>
      %c0_16 = arith.constant 0 : index
      %c0_17 = arith.constant 0 : index
      %c0_18 = arith.constant 0 : index
      %19 = vector.load %arg5[%c0_16, %c0_17, %c0_18] : memref<1x1x32xf32, #tpu.memory_space<vmem>>, vector<1x1x32xf32>
      tpu.vector_store %arg5[%c0_16, %c0_17, %c0_18], %18 {strides = array<i32>} : memref<1x1x32xf32, #tpu.memory_space<vmem>>, vector<1x1x32xf32>,
    } else {
    }
    %c0 = arith.constant 0 : index
    %c0_1 = arith.constant 0 : index
    %c0_2 = arith.constant 0 : index
    %3 = vector.load %arg2[%c0, %c0_1, %c0_2] : memref<1x64x32xf32, #tpu.memory_space<vmem>>, vector<1x64x32xf32>
    %4 = vector.shape_cast %3 : vector<1x64x32xf32> to vector<64x32xf32>
    %c0_3 = arith.constant 0 : index
    %c0_4 = arith.constant 0 : index
    %5 = vector.load %arg3[%c0_3, %c0_4] : memref<32x32xf32, #tpu.memory_space<vmem>>, vector<32x32xf32>
    %cst = arith.constant dense<0.000000e+00> : vector<64x32xf32>
    %6 = tpu.matmul %4, %5, %cst {dimension_numbers = #tpu.dot_dimension_numbers<[1], [0], [0], [1], [0, 0, 1, 1], [], []>} : vector<64x32xf32>, vector<32x32xf32>, vector<64x32xf32> -> vector<64x32xf32>
    %c0_5 = arith.constant 0 : index
    %c0_6 = arith.constant 0 : index
    %c0_7 = arith.constant 0 : index
    %7 = vector.load %arg4[%c0_5, %c0_6, %c0_7] : memref<1x64x32xf32, #tpu.memory_space<vmem>>, vector<1x64x32xf32>
    %8 = vector.shape_cast %7 : vector<1x64x32xf32> to vector<64x32xf32>
    %9 = vector.shape_cast %6 : vector<64x32xf32> to vector<1x64x32xf32>
    tpu.vector_store %arg4[%c0_5, %c0_6, %c0_7], %9 {strides = array<i32>} : memref<1x64x32xf32, #tpu.memory_space<vmem>>, vector<1x64x32xf32>,
    %c0_8 = arith.constant 0 : index
    %c0_9 = arith.constant 0 : index
    %c0_10 = arith.constant 0 : index
    %10 = vector.load %arg5[%c0_8, %c0_9, %c0_10] : memref<1x1x32xf32, #tpu.memory_space<vmem>>, vector<1x1x32xf32>
    %11 = vector.shape_cast %10 : vector<1x1x32xf32> to vector<1x32xf32>
    %cst_11 = arith.constant dense<0.000000e+00> : vector<32xf32>
    %12 = vector.multi_reduction <add>, %6, %cst_11 [0] : vector<64x32xf32> to vector<32xf32>
    %13 = vector.shape_cast %12 : vector<32xf32> to vector<1x32xf32>
    %14 = arith.addf %11, %13 : vector<1x32xf32>
    %c0_12 = arith.constant 0 : index
    %c0_13 = arith.constant 0 : index
    %c0_14 = arith.constant 0 : index
    %15 = vector.load %arg5[%c0_12, %c0_13, %c0_14] : memref<1x1x32xf32, #tpu.memory_space<vmem>>, vector<1x1x32xf32>
    %16 = vector.shape_cast %15 : vector<1x1x32xf32> to vector<1x32xf32>
    %17 = vector.shape_cast %14 : vector<1x32xf32> to vector<1x1x32xf32>
    tpu.vector_store %arg5[%c0_12, %c0_13, %c0_14], %17 {strides = array<i32>} : memref<1x1x32xf32, #tpu.memory_space<vmem>>, vector<1x1x32xf32>,
    return
  }
  func.func @transform_0(%arg0: i32, %arg1: i32) -> (i32, i32, i32) {
    %c0_i32 = arith.constant 0 : i32
    %c0_i32_0 = arith.constant 0 : i32
    return %arg0, %arg1, %c0_i32 : i32, i32, i32
  }
  func.func @transform_1(%arg0: i32, %arg1: i32) -> (i32, i32) {
    %c0_i32 = arith.constant 0 : i32
    %c0_i32_0 = arith.constant 0 : i32
    %c0_i32_1 = arith.constant 0 : i32
    return %c0_i32, %c0_i32_0 : i32, i32
  }
  func.func @transform_2(%arg0: i32, %arg1: i32) -> (i32, i32, i32) {
    %c0_i32 = arith.constant 0 : i32
    %c0_i32_0 = arith.constant 0 : i32
    return %arg0, %arg1, %c0_i32 : i32, i32, i32
  }
  func.func @transform_3(%arg0: i32, %arg1: i32) -> (i32, i32, i32) {
    %c0_i32 = arith.constant 0 : i32
    %c0_i32_0 = arith.constant 0 : i32
    %c0_i32_1 = arith.constant 0 : i32
    return %arg0, %c0_i32, %c0_i32_0 : i32, i32, i32
  }
}

</mosaic_0001>

<llo_original>
// kernel: tpu_custom_call.1
$region0: #{tpu_custom_call.1}
  #allocation0 [shape = 'u32[]', space=smem, size = 0x4, offset = 0x4, fixed_abs, tag = 'smem constant byte address 0x4 - core index']
  #allocation1 [shape = 'u32[144,128]{1,0:T(1,128)}', space=vmem, size = 0x12000, scoped, tag = 'internal scratch']
  %s0 = inlined_call_operand.vmem [shape: f32[2,64,32], index: 0, kind: input, shape index: {}]
  %s1 = inlined_call_operand.vmem [shape: f32[32,32], index: 1, kind: input, shape index: {}]
  %s2 = inlined_call_operand.vmem [shape: f32[2,64,32], index: 2, kind: output, shape index: {0}]
  %s3 = inlined_call_operand.hbm [shape: f32[2,1,32], index: 3, kind: output, shape index: {1}]
  %4 = xla_tuple %s2, %s3
  %s5 = sld [smem:[#allocation0]]
  $region53: #{tpu_custom_call.1} parent=0
    _
  %s7 = ssub.s32 1, %s5
  %s8 = scalar_select 0, %s7, %s5
  $region1: #{tpu_custom_call.1} parent=0
    #allocation2 [shape = 'u8[1024]{0}', space=vmem, size = 0x400, scoped, tag = 'output window, operand 1']
    #allocation3 [shape = 's32[2]{0}', space=sflag, size = 0x8, scoped, tag = 'scoped memory for tpu_custom_call.1']
    %9 = vsyncpa [#allocation3], 0
    %s10 = scalar_lea.sflag [#allocation3], 1
    %11 = vsyncpa %s10, 0
    loop: start=0, step=1, limit=4
    $region2: #{tpu_custom_call.1} parent=1 // loop_pre_header
      _
    $region3: #{tpu_custom_call.1} parent=1 // loop_header
      %s13 = sphi 0, %s17
      %p14 = scmp.ge.s32.totalorder %s13, 4
      %s20 = sphi 0, %s32
      %s21 = sphi 0, %s28
      %s22 = sphi 0, %s20
      %s23 = sphi 0, %s21
      %s24 = sphi 0, %s22
      %s25 = sphi 0, %s23
      %s37 = sphi 0, %s39
      %s40 = sphi 0, %s37
      %s41 = sphi 0, %s40
      %s57 = sphi 0, %s41
      %s61 = sphi 0, %s61
      %s63 = sphi 0, %s61
      %s64 = sphi 0, %s63
      %s78 = sphi 0, %s64
      %s86 = sphi 0, %s88
      %s89 = sphi 0, %s86
      %s90 = sphi 0, %s89
      %s106 = sphi 0, %s90
      %s112 = sphi 0, %s114
      %s115 = sphi 0, %s112
      %s116 = sphi 0, %s115
      %s132 = sphi 0, %s116
    $region4: #{tpu_custom_call.1} parent=1 // loop_header_branch
      %16 = sbr.rel (%p14) target = $region8
    $region5: #{tpu_custom_call.1} parent=1 // loop_body
      %s18 = ssub.s32 %s13, 1
      %s19 = ssub.s32 %s13, 2
      %s26 = sadd.s32 1, %s21
      %p27 = scmp.ge.s32.totalorder %s26, 1
      %s28 = scalar_select %p27, 0, %s26
      %s29 = sadd.s32 1, %s20
      %s30 = scalar_select %p27, %s29, %s20
      %p31 = scmp.ge.s32.totalorder %s30, 2
      %s32 = scalar_select %p31, 0, %s30
      %s33 = ssub.s32 %s20, %s32
      %s34 = ssub.s32 %s21, %s28
      %s35 = sor.u32 %s33, %s34
      %p36 = scmp.eq.s32.totalorder %s35, 0
      %s38 = sadd.s32 %s37, 1
      %s39 = scalar_select %p36, %s37, %s38
      %p42 = pneg %p36
      %p43 = scmp.eq.s32.totalorder %s13, 1
      %p44 = por %p42, %p43
      %p45 = scmp.ne.s32.totalorder %s37, %s40
      %p46 = scmp.eq.s32.totalorder %s13, 0
      %p47 = por %p45, %p46
      %p48 = scmp.ne.s32.totalorder %s37, %s40
      %p49 = scmp.eq.s32.totalorder %s18, 1
      %p50 = por %p48, %p49
      %p51 = scmp.ne.s32.totalorder %s40, %s41
      %p52 = scmp.eq.s32.totalorder %s18, 0
      %p53 = por %p51, %p52
      %p54 = scmp.ne.s32.totalorder %s40, %s41
      %p55 = scmp.eq.s32.totalorder %s19, 1
      %p56 = por %p54, %p55
      %p58 = scmp.ne.s32.totalorder %s41, %s57
      %p59 = scmp.eq.s32.totalorder %s19, 0
      %p60 = por %p58, %p59
      %s62 = sadd.s32 %s61, 1
      %p65 = scmp.eq.s32.totalorder %s13, 1
      %p66 = scmp.ne.s32.totalorder %s61, %s63
      %p67 = scmp.eq.s32.totalorder %s13, 0
      %p68 = por %p66, %p67
      %p69 = scmp.ne.s32.totalorder %s61, %s63
      %p70 = scmp.eq.s32.totalorder %s18, 1
      %p71 = por %p69, %p70
      %p72 = scmp.ne.s32.totalorder %s63, %s64
      %p73 = scmp.eq.s32.totalorder %s18, 0
      %p74 = por %p72, %p73
      %p75 = scmp.ne.s32.totalorder %s63, %s64
      %p76 = scmp.eq.s32.totalorder %s19, 1
      %p77 = por %p75, %p76
      %p79 = scmp.ne.s32.totalorder %s64, %s78
      %p80 = scmp.eq.s32.totalorder %s19, 0
      %p81 = por %p79, %p80
      %s82 = ssub.s32 %s20, %s32
      %s83 = ssub.s32 %s21, %s28
      %s84 = sor.u32 %s82, %s83
      %p85 = scmp.eq.s32.totalorder %s84, 0
      %s87 = sadd.s32 %s86, 1
      %s88 = scalar_select %p85, %s86, %s87
      %p91 = pneg %p85
      %p92 = scmp.eq.s32.totalorder %s13, 1
      %p93 = por %p91, %p92
      %p94 = scmp.ne.s32.totalorder %s86, %s89
      %p95 = scmp.eq.s32.totalorder %s13, 0
      %p96 = por %p94, %p95
      %p97 = scmp.ne.s32.totalorder %s86, %s89
      %p98 = scmp.eq.s32.totalorder %s18, 1
      %p99 = por %p97, %p98
      %p100 = scmp.ne.s32.totalorder %s89, %s90
      %p101 = scmp.eq.s32.totalorder %s18, 0
      %p102 = por %p100, %p101
      %p103 = scmp.ne.s32.totalorder %s89, %s90
      %p104 = scmp.eq.s32.totalorder %s19, 1
      %p105 = por %p103, %p104
      %p107 = scmp.ne.s32.totalorder %s90, %s106
      %p108 = scmp.eq.s32.totalorder %s19, 0
      %p109 = por %p107, %p108
      %s110 = ssub.s32 %s20, %s32
      %p111 = scmp.eq.s32.totalorder %s110, 0
      %s113 = sadd.s32 %s112, 1
      %s114 = scalar_select %p111, %s112, %s113
      %p117 = pneg %p111
      %p118 = scmp.eq.s32.totalorder %s13, 1
      %p119 = por %p117, %p118
      %p120 = scmp.ne.s32.totalorder %s112, %s115
      %p121 = scmp.eq.s32.totalorder %s13, 0
      %p122 = por %p120, %p121
      %p123 = scmp.ne.s32.totalorder %s112, %s115
      %p124 = scmp.eq.s32.totalorder %s18, 1
      %p125 = por %p123, %p124
      %p126 = scmp.ne.s32.totalorder %s115, %s116
      %p127 = scmp.eq.s32.totalorder %s18, 0
      %p128 = por %p126, %p127
      %p129 = scmp.ne.s32.totalorder %s115, %s116
      %p130 = scmp.eq.s32.totalorder %s19, 1
      %p131 = por %p129, %p130
      %p133 = scmp.ne.s32.totalorder %s116, %s132
      %p134 = scmp.eq.s32.totalorder %s19, 0
      %p135 = por %p133, %p134
      %p136 = scmp.le.s32.totalorder 1, %s13
      %p137 = scmp.lt.s32.totalorder %s13, 3
      %p138 = pnand %p136, %p137
      %p139 = pneg %p138
      // Predicated region
      $region9: #{tpu_custom_call.1} parent=5 // pred_check
        _
      $region10: #{tpu_custom_call.1} parent=5 // pred_check_branch
        %141 = sbr.rel (%p138) target = $region12
      $region11: #{tpu_custom_call.1} parent=5 // pred_region
        %s142 = ssub.s32 %s13, 1
        // Predicated region
        $region13: #{tpu_custom_call.1} parent=11 // pred_check
          %p143 = pneg %p74
        $region14: #{tpu_custom_call.1} parent=11 // pred_check_branch
          %145 = sbr.rel (%p143) target = $region16
        $region15: #{tpu_custom_call.1} parent=11 // pred_region
          _
        $region16: #{tpu_custom_call.1} parent=11 // pred_fallthru
          _
      $region12: #{tpu_custom_call.1} parent=5 // pred_fallthru
        _
      %p146 = scmp.lt.s32.totalorder %s13, 2
      // Predicated region
      $region17: #{tpu_custom_call.1} parent=5 // pred_check
        %p147 = pneg %p146
      $region18: #{tpu_custom_call.1} parent=5 // pred_check_branch
        %149 = sbr.rel (%p147) target = $region20
      $region19: #{tpu_custom_call.1} parent=5 // pred_region
        // Predicated region
        $region21: #{tpu_custom_call.1} parent=19 // pred_check
          %p150 = pneg %p47
        $region22: #{tpu_custom_call.1} parent=19 // pred_check_branch
          %152 = sbr.rel (%p150) target = $region24
        $region23: #{tpu_custom_call.1} parent=19 // pred_region
          %s153 = smul.u32 8, %s21
          %p154 = scmp.lt.s32.totalorder %s20, 1
          %s155 = scalar_select %p154, %s20, 1
          %p156 = scmp.lt.s32.totalorder %s153, 7
          %s157 = scalar_select %p156, %s153, 7
          %s158 = smul.addr %s155, 8
          %s159 = sadd.s32 %s157, %s158
          %s160 = smul.addr %s159, 8
          %s161 = scalar_lea.vmem %s0, %s160
          %s162 = smul.u32 8, %s21
        $region24: #{tpu_custom_call.1} parent=19 // pred_fallthru
          _
      $region20: #{tpu_custom_call.1} parent=5 // pred_fallthru
        _
      %p163 = scmp.le.s32.totalorder 1, %s13
      %p164 = scmp.lt.s32.totalorder %s13, 3
      %p165 = pnand %p163, %p164
      %p166 = pneg %p165
      // Predicated region
      $region25: #{tpu_custom_call.1} parent=5 // pred_check
        _
      $region26: #{tpu_custom_call.1} parent=5 // pred_check_branch
        %168 = sbr.rel (%p165) target = $region28
      $region27: #{tpu_custom_call.1} parent=5 // pred_region
        %s169 = ssub.s32 %s13, 1
        %s170 = smul.u32 8, %s23
        %p171 = scmp.lt.s32.totalorder %s22, 1
        %s172 = scalar_select %p171, %s22, 1
        %p173 = scmp.lt.s32.totalorder %s170, 7
        %s174 = scalar_select %p173, %s170, 7
        %s175 = smul.addr %s172, 8
        %s176 = sadd.s32 %s174, %s175
        %s177 = smul.addr %s176, 8
        %s178 = scalar_lea.vmem %s0, %s177
        %p179 = pneg %p53
        %p180 = pneg %p50
        %p181 = pneg %p74
        %p182 = pneg %p71
        %p183 = pneg %p102
        %p184 = pneg %p99
        %s185 = smul.u32 8, %s23
        %p186 = scmp.lt.s32.totalorder %s22, 1
        %s187 = scalar_select %p186, %s22, 1
        %p188 = scmp.lt.s32.totalorder %s185, 7
        %s189 = scalar_select %p188, %s185, 7
        %s190 = smul.addr %s187, 8
        %s191 = sadd.s32 %s189, %s190
        %s192 = smul.addr %s191, 8
        %s193 = scalar_lea.vmem %s2, %s192
        %p194 = pneg %p128
        %p195 = pneg %p125
        %s196 = sand.u32 %s115, 1
        %s197 = scalar_lea.sflag [#allocation3], %s196
        %s198 = sand.u32 %s115, 1
        %s199 = scalar_lea.vmem [#allocation2], %s198
        %s200 = smul.u32 8, %s23
        %p201 = scmp.lt.s32.totalorder %s22, 1
        %s202 = scalar_select %p201, %s22, 1
        %p203 = scmp.lt.s32.totalorder %s200, 7
        %s204 = scalar_select %p203, %s200, 7
        %s205 = smul.addr %s202, 8
        %s206 = sadd.s32 %s204, %s205
        %s207 = smul.addr %s206, 8
        %s208 = scalar_lea.vmem %s0, %s207
        %s209 = smul.u32 8, %s23
        %s210 = smul.u32 8, %s23
        %p211 = scmp.lt.s32.totalorder %s22, 1
        %s212 = scalar_select %p211, %s22, 1
        %p213 = scmp.lt.s32.totalorder %s210, 7
        %s214 = scalar_select %p213, %s210, 7
        %s215 = smul.addr %s212, 8
        %s216 = sadd.s32 %s214, %s215
        %s217 = smul.addr %s216, 8
        %s218 = scalar_lea.vmem %s2, %s217
        %s219 = smul.u32 8, %s23
        %p220 = scmp.eq.s32.totalorder %s23, 0
        // Predicated region
        $region29: #{tpu_custom_call.1} parent=27 // pred_check
          %p221 = pneg %p220
        $region30: #{tpu_custom_call.1} parent=27 // pred_check_branch
          %223 = sbr.rel (%p221) target = $region32
        $region31: #{tpu_custom_call.1} parent=27 // pred_region
          %vm224 = vcmask 253952
          %225 = vst.msk [vmem:[%s199] sm:$0x1] %vm224, 0.0
        $region32: #{tpu_custom_call.1} parent=27 // pred_fallthru
          _
        %v226 = vld [vmem:[%s208] sm:$0xff]
        %v227 = vld [vmem:[%s208 + $0x8] sm:$0xff]
        %v228 = vld [vmem:[%s208 + $0x10] sm:$0xff]
        %v229 = vld [vmem:[%s208 + $0x18] sm:$0xff]
        %v230 = vld [vmem:[%s208 + $0x20] sm:$0xff]
        %v231 = vld [vmem:[%s208 + $0x28] sm:$0xff]
        %v232 = vld [vmem:[%s208 + $0x30] sm:$0xff]
        %v233 = vld [vmem:[%s208 + $0x38] sm:$0xff]
        %v234 = vld [vmem:[%s1] sm:$0xff]
        %v235 = vld [vmem:[%s1 + $0x8] sm:$0xff]
        %v236 = vld [vmem:[%s1 + $0x10] sm:$0xff]
        %v237 = vld [vmem:[%s1 + $0x18] sm:$0xff]
        %vm238 = vcmask 261120
        %v240 = vsel %vm238, %v226, 0
        %v243 = vsel %vm238, %v227, 0
        %v246 = vsel %vm238, %v228, 0
        %v249 = vsel %vm238, %v229, 0
        %v252 = vsel %vm238, %v230, 0
        %v255 = vsel %vm238, %v231, 0
        %v258 = vsel %vm238, %v232, 0
        %v261 = vsel %vm238, %v233, 0
        %263 = vmatprep.subr.mxu0 0.0
        %264 = vmatpush1.msra.mxu0 %v234
        %265 = vmatprep.subr.mxu0 0.0
        %266 = vmatpush1.msra.mxu0 %v235
        %267 = vmatprep.subr.mxu0 0.0
        %268 = vmatpush1.msra.mxu0 %v236
        %269 = vmatprep.subr.mxu0 0.0
        %270 = vmatpush1.msra.mxu0 %v237
        %271 = vmatprep.subr.mxu0 0.0
        %272 = vmatpush1.msra.mxu0 0.0
        %273 = vmatprep.subr.mxu0 0.0
        %274 = vmatpush1.msra.mxu0 0.0
        %275 = vmatprep.subr.mxu0 0.0
        %276 = vmatpush1.msra.mxu0 0.0
        %277 = vmatprep.subr.mxu0 0.0
        %278 = vmatpush1.msra.mxu0 0.0
        %279 = vmatprep.subr.mxu0 0.0
        %280 = vmatpush1.msra.mxu0 0.0
        %281 = vmatprep.subr.mxu0 0.0
        %282 = vmatpush1.msra.mxu0 0.0
        %283 = vmatprep.subr.mxu0 0.0
        %284 = vmatpush1.msra.mxu0 0.0
        %285 = vmatprep.subr.mxu0 0.0
        %286 = vmatpush1.msra.mxu0 0.0
        %287 = vmatprep.subr.mxu0 0.0
        %288 = vmatpush1.msra.mxu0 0.0
        %289 = vmatprep.subr.mxu0 0.0
        %290 = vmatpush1.msra.mxu0 0.0
        %291 = vmatprep.subr.mxu0 0.0
        %292 = vmatpush1.msra.mxu0 0.0
        %293 = vmatprep.subr.mxu0 0.0
        %294 = vmatpush1.msra.mxu0 0.0
        %295 = vmatprep.subr.mxu0 0.0
        %296 = vmatpush1.msra.mxu0 0.0
        %297 = vmatprep.subr.mxu0 0.0
        %298 = vmatpush1.msra.mxu0 0.0
        %299 = vmatprep.subr.mxu0 0.0
        %300 = vmatpush1.msra.mxu0 0.0
        %301 = vmatprep.subr.mxu0 0.0
        %302 = vmatpush1.msra.mxu0 0.0
        %303 = vmatprep.subr.mxu0 0.0
        %304 = vmatpush1.msra.mxu0 0.0
        %305 = vmatprep.subr.mxu0 0.0
        %306 = vmatpush1.msra.mxu0 0.0
        %307 = vmatprep.subr.mxu0 0.0
        %308 = vmatpush1.msra.mxu0 0.0
        %309 = vmatprep.subr.mxu0 0.0
        %310 = vmatpush1.msra.mxu0 0.0
        %311 = vmatprep.subr.mxu0 0.0
        %312 = vmatpush1.msra.mxu0 0.0
        %313 = vmatprep.subr.mxu0 0.0
        %314 = vmatpush1.msra.mxu0 0.0
        %315 = vmatprep.subr.mxu0 0.0
        %316 = vmatpush1.msra.mxu0 0.0
        %317 = vmatprep.subr.mxu0 0.0
        %318 = vmatpush1.msra.mxu0 0.0
        %319 = vmatprep.subr.mxu0 0.0
        %320 = vmatpush1.msra.mxu0 0.0
        %321 = vmatprep.subr.mxu0 0.0
        %322 = vmatpush1.msra.mxu0 0.0
        %323 = vmatprep.subr.mxu0 0.0
        %324 = vmatpush1.msra.mxu0 0.0
        %325 = vmatprep.subr.mxu0 0.0
        %326 = vmatpush1.msra.mxu0 0.0
        %327 = vmatprep.mubr.f32.mxu0 0.0
        %328 = vmatmul.mubr.f32.gmra.mrb[0].mxu0 %v240
        %v329 = vpop.f32.mrb[0].mxu0
        %v330 = vadd.f32 0.0, %v329
        %v331 = vpop.f32.mrb[0].mxu0
        %332 = vmatprep.mubr.f32.mxu0 0.0
        %333 = vmatmul.mubr.f32.gmra.mrb[0].mxu0 %v243
        %v334 = vpop.f32.mrb[0].mxu0
        %v335 = vadd.f32 0.0, %v334
        %v336 = vpop.f32.mrb[0].mxu0
        %337 = vmatprep.mubr.f32.mxu0 0.0
        %338 = vmatmul.mubr.f32.gmra.mrb[0].mxu0 %v246
        %v339 = vpop.f32.mrb[0].mxu0
        %v340 = vadd.f32 0.0, %v339
        %v341 = vpop.f32.mrb[0].mxu0
        %342 = vmatprep.mubr.f32.mxu0 0.0
        %343 = vmatmul.mubr.f32.gmra.mrb[0].mxu0 %v249
        %v344 = vpop.f32.mrb[0].mxu0
        %v345 = vadd.f32 0.0, %v344
        %v346 = vpop.f32.mrb[0].mxu0
        %347 = vmatprep.mubr.f32.mxu0 0.0
        %348 = vmatmul.mubr.f32.gmra.mrb[0].mxu0 %v252
        %v349 = vpop.f32.mrb[0].mxu0
        %v350 = vadd.f32 0.0, %v349
        %v351 = vpop.f32.mrb[0].mxu0
        %352 = vmatprep.mubr.f32.mxu0 0.0
        %353 = vmatmul.mubr.f32.gmra.mrb[0].mxu0 %v255
        %v354 = vpop.f32.mrb[0].mxu0
        %v355 = vadd.f32 0.0, %v354
        %v356 = vpop.f32.mrb[0].mxu0
        %357 = vmatprep.mubr.f32.mxu0 0.0
        %358 = vmatmul.mubr.f32.gmra.mrb[0].mxu0 %v258
        %v359 = vpop.f32.mrb[0].mxu0
        %v360 = vadd.f32 0.0, %v359
        %v361 = vpop.f32.mrb[0].mxu0
        %362 = vmatprep.mubr.f32.mxu0 0.0
        %363 = vmatmul.mubr.f32.gmra.mrb[0].mxu0 %v261
        %v364 = vpop.f32.mrb[0].mxu0
        %v365 = vadd.f32 0.0, %v364
        %v366 = vpop.f32.mrb[0].mxu0
        %367 = vdwg.mxu0
        %368 = vst.msk [vmem:[%s218] sm:$0xff] %vm238, %v330
        %369 = vst.msk [vmem:[%s218 + $0x8] sm:$0xff] %vm238, %v335
        %370 = vst.msk [vmem:[%s218 + $0x10] sm:$0xff] %vm238, %v340
        %371 = vst.msk [vmem:[%s218 + $0x18] sm:$0xff] %vm238, %v345
        %372 = vst.msk [vmem:[%s218 + $0x20] sm:$0xff] %vm238, %v350
        %373 = vst.msk [vmem:[%s218 + $0x28] sm:$0xff] %vm238, %v355
        %374 = vst.msk [vmem:[%s218 + $0x30] sm:$0xff] %vm238, %v360
        %375 = vst.msk [vmem:[%s218 + $0x38] sm:$0xff] %vm238, %v365
        %v376 = vld [vmem:[%s199] sm:$0x1]
        %v377 = vsel %vm238, %v330, 0.0
        %v378 = vsel %vm238, %v335, 0.0
        %v379 = vadd.f32 %v377, %v378
        %v380 = vsel %vm238, %v340, 0.0
        %v381 = vadd.f32 %v379, %v380
        %v382 = vsel %vm238, %v345, 0.0
        %v383 = vadd.f32 %v381, %v382
        %v384 = vsel %vm238, %v350, 0.0
        %v385 = vadd.f32 %v383, %v384
        %v386 = vsel %vm238, %v355, 0.0
        %v387 = vadd.f32 %v385, %v386
        %v388 = vsel %vm238, %v360, 0.0
        %v389 = vadd.f32 %v387, %v388
        %v390 = vsel %vm238, %v365, 0.0
        %v391 = vadd.f32 %v389, %v390
        %v392 = vrot.slane %v391, 4
        %v393 = vadd.f32 %v391, %v392
        %v394 = vrot.slane %v393, 2
        %v395 = vadd.f32 %v393, %v394
        %v396 = vrot.slane %v395, 1
        %v397 = vadd.f32 %v395, %v396
        %v398 = vadd.f32 %v376, %v397
        %vm399 = vcmask 253952
        %400 = vst.msk [vmem:[%s199] sm:$0x1] %vm399, %v398
        %s401 = smul.u32 8, %s23
        %p402 = scmp.lt.s32.totalorder %s22, 1
        %s403 = scalar_select %p402, %s22, 1
        %p404 = scmp.lt.s32.totalorder %s401, 7
        %s405 = scalar_select %p404, %s401, 7
        %s406 = smul.addr %s403, 8
        %s407 = sadd.s32 %s405, %s406
        %s408 = smul.addr %s407, 8
        %s409 = scalar_lea.vmem %s2, %s408
        %s410 = sand.u32 %s115, 1
        %s411 = scalar_lea.sflag [#allocation3], %s410
        %s412 = sand.u32 %s115, 1
        %s413 = scalar_lea.vmem [#allocation2], %s412
        // Predicated region
        $region33: #{tpu_custom_call.1} parent=27 // pred_check
          %p414 = pneg %p99
        $region34: #{tpu_custom_call.1} parent=27 // pred_check_branch
          %416 = sbr.rel (%p414) target = $region36
        $region35: #{tpu_custom_call.1} parent=27 // pred_region
          %s417 = smul.u32 8, %s23
        $region36: #{tpu_custom_call.1} parent=27 // pred_fallthru
          _
        // Predicated region
        $region37: #{tpu_custom_call.1} parent=27 // pred_check
          %p418 = pneg %p125
        $region38: #{tpu_custom_call.1} parent=27 // pred_check_branch
          %420 = sbr.rel (%p418) target = $region40
        $region39: #{tpu_custom_call.1} parent=27 // pred_region
          %s422 = ssub.s32 16, 16
          %423 = vsyncadd %s411, %s422
          %s424 = smul.addr %s22, 16
          %s425 = scalar_lea.hbm %s3, %s424
          %s427 = sshll.u32 %s413, 4
          %s428 = int_to_ptr.vmem [resolvable:$true] %s427
          %430 = dma.vmem_to_hbm [thread:$0]  %s428, 16, %s425, %s411
        $region40: #{tpu_custom_call.1} parent=27 // pred_fallthru
          _
      $region28: #{tpu_custom_call.1} parent=5 // pred_fallthru
        _
      %p431 = scmp.le.s32.totalorder 2, %s13
      // Predicated region
      $region41: #{tpu_custom_call.1} parent=5 // pred_check
        %p432 = pneg %p431
      $region42: #{tpu_custom_call.1} parent=5 // pred_check_branch
        %434 = sbr.rel (%p432) target = $region44
      $region43: #{tpu_custom_call.1} parent=5 // pred_region
        %s435 = ssub.s32 %s13, 2
        // Predicated region
        $region45: #{tpu_custom_call.1} parent=43 // pred_check
          %p436 = pneg %p105
        $region46: #{tpu_custom_call.1} parent=43 // pred_check_branch
          %438 = sbr.rel (%p436) target = $region48
        $region47: #{tpu_custom_call.1} parent=43 // pred_region
          %s439 = smul.u32 8, %s25
          %p440 = scmp.lt.s32.totalorder %s24, 1
          %s441 = scalar_select %p440, %s24, 1
          %p442 = scmp.lt.s32.totalorder %s439, 7
          %s443 = scalar_select %p442, %s439, 7
          %s444 = smul.addr %s441, 8
          %s445 = sadd.s32 %s443, %s444
          %s446 = smul.addr %s445, 8
          %s447 = scalar_lea.vmem %s2, %s446
        $region48: #{tpu_custom_call.1} parent=43 // pred_fallthru
          _
        // Predicated region
        $region49: #{tpu_custom_call.1} parent=43 // pred_check
          %p448 = pneg %p131
        $region50: #{tpu_custom_call.1} parent=43 // pred_check_branch
          %450 = sbr.rel (%p448) target = $region52
        $region51: #{tpu_custom_call.1} parent=43 // pred_region
          %s451 = sand.u32 %s116, 1
          %s452 = scalar_lea.sflag [#allocation3], %s451
          %s453 = sand.u32 %s116, 1
          %s454 = scalar_lea.vmem [#allocation2], %s453
          %455 = dma.done %s452, 16
        $region52: #{tpu_custom_call.1} parent=43 // pred_fallthru
          _
      $region44: #{tpu_custom_call.1} parent=5 // pred_fallthru
        _
    $region6: #{tpu_custom_call.1} parent=1 // loop_footer
      %s17 = sadd.s32 1, %s13
    $region7: #{tpu_custom_call.1} parent=1 // loop_footer_branch
      %12 = sbr.rel target = $region3
    $region8: #{tpu_custom_call.1} parent=1 // loop_exit
      _
    %456 = vsyncpa [#allocation3], 1
    %s457 = scalar_lea.sflag [#allocation3], 1
    %458 = vsyncpa %s457, 1

</llo_original>
